<compile_context>
chip_gen: v7x
topology: tpu7x:2x2x1
jax: 0.10.0
libtpu: 0.0.40
codegen_flags: <defaults>
</compile_context>

<pallas_src>
import functools

import jax
import jax.numpy as jnp
from jax.experimental import pallas as pl
from jax.experimental.pallas import tpu as pltpu


def _round_up(v, m):
    return -(-v // m) * m


def _conv_gemm_kernel(x_ref, w_ref, b_ref, o_ref, *, n_oy, n_ox, wh, l_slot):
    """One image per grid step, single K = KH*KW*C_in matmul.

    x_ref: (1, s*s*C_in, l_pad)   phase-split padded input (compute dtype)
    w_ref: (C_out, KH*KW*C_in)    im2col-ordered weight matrix (compute dtype)
    b_ref: (C_out, 1)             bias, f32
    o_ref: (1, C_out, l_slot)     lane-dense output block (l_slot % 128 == 0)
    """
    # In-VMEM im2col: stack the (kh/s)*(kw/s) shifted whole phase slabs along
    # the contraction axis.  Each slab is a (s*s*C_in, l_slot) lane-shifted view.
    slabs = []
    for oy in range(n_oy):
        for ox in range(n_ox):
            off = oy * wh + ox
            slabs.append(x_ref[0, :, off:off + l_slot])
    xcol = slabs[0] if len(slabs) == 1 else jnp.concatenate(slabs, axis=0)

    # One MXU contraction (K = KH*KW*C_in), f32 accumulation in the MXU.
    acc = jnp.dot(w_ref[...], xcol, preferred_element_type=jnp.float32)
    o_ref[0] = (acc + b_ref[...]).astype(o_ref.dtype)


@functools.partial(jax.jit, static_argnames=("stride", "padding", "compute_dtype"))
def conv2d_pallas(x, weight, bias, *, stride=2, padding=1,
                  compute_dtype=jnp.bfloat16):
    """x: (N, C_in, H, W) NCHW; weight: (C_out, C_in, KH, KW) OIHW; bias: (C_out,)."""
    n, c_in, h, w = x.shape
    c_out, c_in_w, kh, kw = weight.shape
    assert c_in == c_in_w, (c_in, c_in_w)
    s = int(stride)
    assert kh % s == 0 and kw % s == 0, "kernel taps must tile the stride phases"

    hp, wp = h + 2 * padding, w + 2 * padding
    h_out = (hp - kh) // s + 1
    w_out = (wp - kw) // s + 1

    # Pad spatial dims up to a multiple of the stride so the phase split is exact.
    hp2, wp2 = _round_up(hp, s), _round_up(wp, s)
    hh, wh = hp2 // s, wp2 // s

    n_oy, n_ox = kh // s, kw // s
    l_out = h_out * wh                    # valid flat pixels per image
    l_slot = _round_up(l_out, 128)        # lane-dense output slot (unmasked vst)
    max_off = (n_oy - 1) * wh + (n_ox - 1)
    l_pad = _round_up(max(hh * wh, max_off + l_slot), 128)

    # Cast to compute dtype BEFORE pad/transpose: halves prologue HBM traffic.
    x_c = x.astype(compute_dtype)
    x_pad = jnp.pad(
        x_c,
        ((0, 0), (0, 0),
         (padding, padding + hp2 - hp),
         (padding, padding + wp2 - wp)))

    # Phase split, merging (phase, channel) into one 16-row sublane slab:
    # (N, C, Hh, s, Wh, s) -> (N, s, s, C, Hh, Wh) -> (N, s*s*C, Hh*Wh)
    # row index = (py*s + px)*C_in + c ; flat pixel = hy*Wh + wx
    xph = (x_pad.reshape(n, c_in, hh, s, wh, s)
                .transpose(0, 3, 5, 1, 2, 4)
                .reshape(n, s * s * c_in, hh * wh))
    if l_pad > hh * wh:
        xph = jnp.pad(xph, ((0, 0), (0, 0), (0, l_pad - hh * wh)))

    # im2col-ordered weight matrix (C_out, KH*KW*C_in); K order = (oy, ox, py, px, c)
    # matching the slab-stacking order in the kernel.
    w_mat = (weight.reshape(c_out, c_in, n_oy, s, n_ox, s)
                   .transpose(0, 2, 4, 3, 5, 1)
                   .reshape(c_out, kh * kw * c_in)
                   .astype(compute_dtype))
    b_col = bias.reshape(c_out, 1).astype(jnp.float32)

    kernel = functools.partial(
        _conv_gemm_kernel, n_oy=n_oy, n_ox=n_ox, wh=wh, l_slot=l_slot)

    out_flat = pl.pallas_call(
        kernel,
        out_shape=jax.ShapeDtypeStruct((n, c_out, l_slot), jnp.float32),
        grid=(n,),
        in_specs=[
            pl.BlockSpec((1, s * s * c_in, l_pad), lambda b: (b, 0, 0)),
            pl.BlockSpec((c_out, kh * kw * c_in), lambda b: (0, 0)),
            pl.BlockSpec((c_out, 1), lambda b: (0, 0)),
        ],
        out_specs=pl.BlockSpec((1, c_out, l_slot), lambda b: (b, 0, 0)),
        compiler_params=pltpu.CompilerParams(
            dimension_semantics=("parallel",)),
    )(xph, w_mat, b_col)

    # Already NCHW-ordered: one fused slice pass crops the lane padding and the
    # (Wh - W_out) garbage columns.  No transpose pass over the output.
    out = (out_flat[:, :, :l_out]
           .reshape(n, c_out, h_out, wh)[:, :, :, :w_out])
    return out.astype(x.dtype)


def conv2d_reference(x, weight, bias, *, stride, padding, compute_dtype):
    """XLA reference with the same operand precision (bf16 in, f32 accumulate)."""
    out = jax.lax.conv_general_dilated(
        x.astype(compute_dtype), weight.astype(compute_dtype),
        window_strides=(stride, stride),
        padding=[(padding, padding), (padding, padding)],
        dimension_numbers=("NCHW", "OIHW", "NCHW"),
        preferred_element_type=jnp.float32)
    return out + bias.reshape(1, -1, 1, 1)


def _spectral_norm_weight(weight, u, eps=1e-12):
    """One power-iteration step spectral norm, mirroring SpectralNorm.compute_weight."""
    c_out = weight.shape[0]
    w_mat = weight.reshape(c_out, -1)            # (C_out, K)
    v = w_mat.T @ u                              # (K, 1)
    v = v / (jnp.linalg.norm(v) + eps)
    u_new = w_mat @ v                            # (C_out, 1)
    u_new = u_new / (jnp.linalg.norm(u_new) + eps)
    sigma = (u_new.T @ w_mat @ v)[0, 0]
    w_sn = w_mat / sigma
    return w_sn.reshape(weight.shape), u_new


def make_conv2d_params(key, in_channels, out_channels, kernel_size=4,
                       spectral_normed=False):
    """Deterministic parameter init matching nn.Conv2d shapes (OIHW weight + bias)."""
    k_w, k_b, k_u = jax.random.split(key, 3)
    fan_in = in_channels * kernel_size * kernel_size
    bound = 1.0 / jnp.sqrt(fan_in)
    weight = jax.random.uniform(
        k_w, (out_channels, in_channels, kernel_size, kernel_size),
        minval=-bound, maxval=bound, dtype=jnp.float32)
    bias = jax.random.uniform(
        k_b, (out_channels,), minval=-bound, maxval=bound, dtype=jnp.float32)
    if spectral_normed:
        u = jax.random.normal(k_u, (out_channels, 1), dtype=jnp.float32) * 0.1
        weight, _ = _spectral_norm_weight(weight, u)
    return weight, bias


if __name__ == "__main__":
    key = jax.random.PRNGKey(0)
    k_x, k_p, k_p2 = jax.random.split(key, 3)

    # Module config: conv2d(in_channels=4, out_channels=8, padding=1,
    #                       kernel_size=4, stride=2, spectral_normed=False)
    in_channels, out_channels, padding, kernel_size, stride = 4, 8, 1, 4, 2

    x = jax.random.normal(k_x, (2, in_channels, 16, 16), dtype=jnp.float32)
    weight, bias = make_conv2d_params(k_p, in_channels, out_channels, kernel_size)

    out = conv2d_pallas(x, weight, bias, stride=stride, padding=padding)
    jax.block_until_ready(out)
    assert out.shape == (2, out_channels, 8, 8), out.shape

    # Correctness vs. an XLA conv at matched operand precision.
    ref = conv2d_reference(x, weight, bias, stride=stride, padding=padding,
                           compute_dtype=jnp.bfloat16)
    max_err = float(jnp.max(jnp.abs(out - ref)))
    assert jnp.allclose(out, ref, atol=5e-3, rtol=5e-3), max_err

    # Spectral-normed variant (weight-side transform in plain JAX, conv in Pallas).
    w_sn, b_sn = make_conv2d_params(k_p2, in_channels, out_channels, kernel_size,
                                    spectral_normed=True)
    out_sn = conv2d_pallas(x, w_sn, b_sn, stride=stride, padding=padding)
    jax.block_until_ready(out_sn)
    assert out_sn.shape == (2, out_channels, 8, 8), out_sn.shape
    ref_sn = conv2d_reference(x, w_sn, b_sn, stride=stride, padding=padding,
                              compute_dtype=jnp.bfloat16)
    assert jnp.allclose(out_sn, ref_sn, atol=5e-3, rtol=5e-3)

    print("KERNEL_OK")
</pallas_src>

<mosaic_0001>
module attributes {stable_mosaic.version = 11 : i64} {
  func.func @_conv_gemm_kernel(%arg0: i32, %arg1: memref<1x16x256xbf16, #tpu.memory_space<vmem>>, %arg2: memref<8x64xbf16, #tpu.memory_space<vmem>>, %arg3: memref<8x1xf32, #tpu.memory_space<vmem>>, %arg4: memref<1x8x128xf32, #tpu.memory_space<vmem>>) attributes {dimension_semantics = [#tpu.dimension_semantics<parallel>], iteration_bounds = array<i64: 2>, scalar_prefetch = 0 : i64, scratch_operands = 0 : i64, tpu.core_type = #tpu.core_type<tc>, window_params = [{transform_indices = @transform_0, window_bounds = array<i64: 1, 16, 256>}, {pipeline_mode = #tpu.pipeline_mode<synchronous>, transform_indices = @transform_1, window_bounds = array<i64: 8, 64>}, {pipeline_mode = #tpu.pipeline_mode<synchronous>, transform_indices = @transform_2, window_bounds = array<i64: 8, 1>}, {transform_indices = @transform_3, window_bounds = array<i64: 1, 8, 128>}]} {
    %c0 = arith.constant 0 : index
    %c0_0 = arith.constant 0 : index
    %c0_1 = arith.constant 0 : index
    %0 = vector.load %arg1[%c0, %c0_0, %c0_1] : memref<1x16x256xbf16, #tpu.memory_space<vmem>>, vector<1x16x128xbf16>
    %1 = vector.shape_cast %0 : vector<1x16x128xbf16> to vector<16x128xbf16>
    %c0_2 = arith.constant 0 : index
    %c0_3 = arith.constant 0 : index
    %c1 = arith.constant 1 : index
    %2 = vector.load %arg1[%c0_2, %c0_3, %c1] : memref<1x16x256xbf16, #tpu.memory_space<vmem>>, vector<1x16x128xbf16>
    %3 = vector.shape_cast %2 : vector<1x16x128xbf16> to vector<16x128xbf16>
    %c0_4 = arith.constant 0 : index
    %c0_5 = arith.constant 0 : index
    %c9 = arith.constant 9 : index
    %4 = vector.load %arg1[%c0_4, %c0_5, %c9] : memref<1x16x256xbf16, #tpu.memory_space<vmem>>, vector<1x16x128xbf16>
    %5 = vector.shape_cast %4 : vector<1x16x128xbf16> to vector<16x128xbf16>
    %c0_6 = arith.constant 0 : index
    %c0_7 = arith.constant 0 : index
    %c10 = arith.constant 10 : index
    %6 = vector.load %arg1[%c0_6, %c0_7, %c10] : memref<1x16x256xbf16, #tpu.memory_space<vmem>>, vector<1x16x128xbf16>
    %7 = vector.shape_cast %6 : vector<1x16x128xbf16> to vector<16x128xbf16>
    %8 = tpu.concatenate %1, %3, %5, %7 in 0 : vector<16x128xbf16>, vector<16x128xbf16>, vector<16x128xbf16>, vector<16x128xbf16> -> vector<64x128xbf16>
    %c0_8 = arith.constant 0 : index
    %c0_9 = arith.constant 0 : index
    %9 = vector.load %arg2[%c0_8, %c0_9] : memref<8x64xbf16, #tpu.memory_space<vmem>>, vector<8x64xbf16>
    %cst = arith.constant dense<0.000000e+00> : vector<8x128xf32>
    %10 = tpu.matmul %9, %8, %cst {dimension_numbers = #tpu.dot_dimension_numbers<[1], [0], [0], [1], [0, 0, 1, 1], [], []>} : vector<8x64xbf16>, vector<64x128xbf16>, vector<8x128xf32> -> vector<8x128xf32>
    %c0_10 = arith.constant 0 : index
    %c0_11 = arith.constant 0 : index
    %11 = vector.load %arg3[%c0_10, %c0_11] : memref<8x1xf32, #tpu.memory_space<vmem>>, vector<8x1xf32>
    %12 = vector.broadcast %11 : vector<8x1xf32> to vector<8x128xf32>
    %13 = arith.addf %10, %12 : vector<8x128xf32>
    %c0_12 = arith.constant 0 : index
    %c0_13 = arith.constant 0 : index
    %c0_14 = arith.constant 0 : index
    %14 = vector.load %arg4[%c0_12, %c0_13, %c0_14] : memref<1x8x128xf32, #tpu.memory_space<vmem>>, vector<1x8x128xf32>
    %15 = vector.shape_cast %14 : vector<1x8x128xf32> to vector<8x128xf32>
    %16 = vector.shape_cast %13 : vector<8x128xf32> to vector<1x8x128xf32>
    tpu.vector_store %arg4[%c0_12, %c0_13, %c0_14], %16 {strides = array<i32>} : memref<1x8x128xf32, #tpu.memory_space<vmem>>, vector<1x8x128xf32>,
    return
  }
  func.func @transform_0(%arg0: i32) -> (i32, i32, i32) {
    %c0_i32 = arith.constant 0 : i32
    %c0_i32_0 = arith.constant 0 : i32
    %c0_i32_1 = arith.constant 0 : i32
    return %arg0, %c0_i32, %c0_i32_0 : i32, i32, i32
  }
  func.func @transform_1(%arg0: i32) -> (i32, i32) {
    %c0_i32 = arith.constant 0 : i32
    %c0_i32_0 = arith.constant 0 : i32
    %c0_i32_1 = arith.constant 0 : i32
    return %c0_i32, %c0_i32_0 : i32, i32
  }
  func.func @transform_2(%arg0: i32) -> (i32, i32) {
    %c0_i32 = arith.constant 0 : i32
    %c0_i32_0 = arith.constant 0 : i32
    %c0_i32_1 = arith.constant 0 : i32
    return %c0_i32, %c0_i32_0 : i32, i32
  }
  func.func @transform_3(%arg0: i32) -> (i32, i32, i32) {
    %c0_i32 = arith.constant 0 : i32
    %c0_i32_0 = arith.constant 0 : i32
    %c0_i32_1 = arith.constant 0 : i32
    return %arg0, %c0_i32, %c0_i32_0 : i32, i32, i32
  }
}

</mosaic_0001>

<llo_original>
// kernel: conv2d_pallas.1
$region0: #{conv2d_pallas.1}
  #allocation0 [shape = 'u32[]', space=smem, size = 0x4, offset = 0x4, fixed_abs, tag = 'smem constant byte address 0x4 - core index']
  #allocation1 [shape = 'u32[144,128]{1,0:T(1,128)}', space=vmem, size = 0x12000, scoped, tag = 'internal scratch']
  %s0 = inlined_call_operand.vmem [shape: bf16[2,16,256], index: 0, kind: input, shape index: {}]
  %s1 = inlined_call_operand.vmem [shape: bf16[8,64], index: 1, kind: input, shape index: {}]
  %s2 = inlined_call_operand.vmem [shape: f32[8,1], index: 2, kind: input, shape index: {}]
  %s3 = inlined_call_operand.vmem [shape: f32[2,8,128], index: 3, kind: output, shape index: {}]
  %s4 = sld [smem:[#allocation0]]
  $region45: #{conv2d_pallas.1} parent=0
    _
  %s6 = ssub.s32 1, %s4
  %s7 = scalar_select 0, %s6, %s4
  loop: start=0, step=1, limit=4
  $region2: #{conv2d_pallas.1} parent=0 // loop_pre_header
    _
  $region3: #{conv2d_pallas.1} parent=0 // loop_header
    %s9 = sphi 0, %s13
    %p10 = scmp.ge.s32.totalorder %s9, 4
    %s19 = sphi 0, %s21
    %s22 = sphi 0, %s19
    %s23 = sphi 0, %s22
    %s39 = sphi 0, %s23
    %s43 = sphi 0, %s43
    %s45 = sphi 0, %s43
    %s46 = sphi 0, %s45
    %s60 = sphi 0, %s46
    %s64 = sphi 0, %s64
    %s66 = sphi 0, %s64
    %s67 = sphi 0, %s66
    %s81 = sphi 0, %s67
    %s87 = sphi 0, %s89
    %s90 = sphi 0, %s87
    %s91 = sphi 0, %s90
    %s107 = sphi 0, %s91
  $region4: #{conv2d_pallas.1} parent=0 // loop_header_branch
    %12 = sbr.rel (%p10) target = $region8
  $region5: #{conv2d_pallas.1} parent=0 // loop_body
    %s14 = ssub.s32 %s9, 1
    %s15 = ssub.s32 %s9, 2
    %s16 = sadd.s32 %s9, 1
    %s17 = ssub.s32 %s9, %s16
    %p18 = scmp.eq.s32.totalorder %s17, 0
    %s20 = sadd.s32 %s19, 1
    %s21 = scalar_select %p18, %s19, %s20
    %p24 = pneg %p18
    %p25 = scmp.eq.s32.totalorder %s9, 1
    %p26 = por %p24, %p25
    %p27 = scmp.ne.s32.totalorder %s19, %s22
    %p28 = scmp.eq.s32.totalorder %s9, 0
    %p29 = por %p27, %p28
    %p30 = scmp.ne.s32.totalorder %s19, %s22
    %p31 = scmp.eq.s32.totalorder %s14, 1
    %p32 = por %p30, %p31
    %p33 = scmp.ne.s32.totalorder %s22, %s23
    %p34 = scmp.eq.s32.totalorder %s14, 0
    %p35 = por %p33, %p34
    %p36 = scmp.ne.s32.totalorder %s22, %s23
    %p37 = scmp.eq.s32.totalorder %s15, 1
    %p38 = por %p36, %p37
    %p40 = scmp.ne.s32.totalorder %s23, %s39
    %p41 = scmp.eq.s32.totalorder %s15, 0
    %p42 = por %p40, %p41
    %s44 = sadd.s32 %s43, 1
    %p47 = scmp.eq.s32.totalorder %s9, 1
    %p48 = scmp.ne.s32.totalorder %s43, %s45
    %p49 = scmp.eq.s32.totalorder %s9, 0
    %p50 = por %p48, %p49
    %p51 = scmp.ne.s32.totalorder %s43, %s45
    %p52 = scmp.eq.s32.totalorder %s14, 1
    %p53 = por %p51, %p52
    %p54 = scmp.ne.s32.totalorder %s45, %s46
    %p55 = scmp.eq.s32.totalorder %s14, 0
    %p56 = por %p54, %p55
    %p57 = scmp.ne.s32.totalorder %s45, %s46
    %p58 = scmp.eq.s32.totalorder %s15, 1
    %p59 = por %p57, %p58
    %p61 = scmp.ne.s32.totalorder %s46, %s60
    %p62 = scmp.eq.s32.totalorder %s15, 0
    %p63 = por %p61, %p62
    %s65 = sadd.s32 %s64, 1
    %p68 = scmp.eq.s32.totalorder %s9, 1
    %p69 = scmp.ne.s32.totalorder %s64, %s66
    %p70 = scmp.eq.s32.totalorder %s9, 0
    %p71 = por %p69, %p70
    %p72 = scmp.ne.s32.totalorder %s64, %s66
    %p73 = scmp.eq.s32.totalorder %s14, 1
    %p74 = por %p72, %p73
    %p75 = scmp.ne.s32.totalorder %s66, %s67
    %p76 = scmp.eq.s32.totalorder %s14, 0
    %p77 = por %p75, %p76
    %p78 = scmp.ne.s32.totalorder %s66, %s67
    %p79 = scmp.eq.s32.totalorder %s15, 1
    %p80 = por %p78, %p79
    %p82 = scmp.ne.s32.totalorder %s67, %s81
    %p83 = scmp.eq.s32.totalorder %s15, 0
    %p84 = por %p82, %p83
    %s85 = ssub.s32 %s9, %s16
    %p86 = scmp.eq.s32.totalorder %s85, 0
    %s88 = sadd.s32 %s87, 1
    %s89 = scalar_select %p86, %s87, %s88
    %p92 = pneg %p86
    %p93 = scmp.eq.s32.totalorder %s9, 1
    %p94 = por %p92, %p93
    %p95 = scmp.ne.s32.totalorder %s87, %s90
    %p96 = scmp.eq.s32.totalorder %s9, 0
    %p97 = por %p95, %p96
    %p98 = scmp.ne.s32.totalorder %s87, %s90
    %p99 = scmp.eq.s32.totalorder %s14, 1
    %p100 = por %p98, %p99
    %p101 = scmp.ne.s32.totalorder %s90, %s91
    %p102 = scmp.eq.s32.totalorder %s14, 0
    %p103 = por %p101, %p102
    %p104 = scmp.ne.s32.totalorder %s90, %s91
    %p105 = scmp.eq.s32.totalorder %s15, 1
    %p106 = por %p104, %p105
    %p108 = scmp.ne.s32.totalorder %s91, %s107
    %p109 = scmp.eq.s32.totalorder %s15, 0
    %p110 = por %p108, %p109
    %p111 = scmp.le.s32.totalorder 1, %s9
    %p112 = scmp.lt.s32.totalorder %s9, 3
    %p113 = pnand %p111, %p112
    %p114 = pneg %p113
    // Predicated region
    $region9: #{conv2d_pallas.1} parent=5 // pred_check
      _
    $region10: #{conv2d_pallas.1} parent=5 // pred_check_branch
      %116 = sbr.rel (%p113) target = $region12
    $region11: #{conv2d_pallas.1} parent=5 // pred_region
      %s117 = ssub.s32 %s9, 1
      // Predicated region
      $region13: #{conv2d_pallas.1} parent=11 // pred_check
        %p118 = pneg %p56
      $region14: #{conv2d_pallas.1} parent=11 // pred_check_branch
        %120 = sbr.rel (%p118) target = $region16
      $region15: #{conv2d_pallas.1} parent=11 // pred_region
        _
      $region16: #{conv2d_pallas.1} parent=11 // pred_fallthru
        _
      // Predicated region
      $region17: #{conv2d_pallas.1} parent=11 // pred_check
        %p121 = pneg %p77
      $region18: #{conv2d_pallas.1} parent=11 // pred_check_branch
        %123 = sbr.rel (%p121) target = $region20
      $region19: #{conv2d_pallas.1} parent=11 // pred_region
        _
      $region20: #{conv2d_pallas.1} parent=11 // pred_fallthru
        _
    $region12: #{conv2d_pallas.1} parent=5 // pred_fallthru
      _
    %p124 = scmp.lt.s32.totalorder %s9, 2
    // Predicated region
    $region21: #{conv2d_pallas.1} parent=5 // pred_check
      %p125 = pneg %p124
    $region22: #{conv2d_pallas.1} parent=5 // pred_check_branch
      %127 = sbr.rel (%p125) target = $region24
    $region23: #{conv2d_pallas.1} parent=5 // pred_region
      // Predicated region
      $region25: #{conv2d_pallas.1} parent=23 // pred_check
        %p128 = pneg %p29
      $region26: #{conv2d_pallas.1} parent=23 // pred_check_branch
        %130 = sbr.rel (%p128) target = $region28
      $region27: #{conv2d_pallas.1} parent=23 // pred_region
        %p131 = scmp.lt.s32.totalorder %s9, 1
        %s132 = scalar_select %p131, %s9, 1
        %s133 = smul.addr %s132, 4
        %s134 = smul.addr %s133, 4
        %s135 = scalar_lea.vmem %s0, %s134
      $region28: #{conv2d_pallas.1} parent=23 // pred_fallthru
        _
    $region24: #{conv2d_pallas.1} parent=5 // pred_fallthru
      _
    %p136 = scmp.le.s32.totalorder 1, %s9
    %p137 = scmp.lt.s32.totalorder %s9, 3
    %p138 = pnand %p136, %p137
    %p139 = pneg %p138
    // Predicated region
    $region29: #{conv2d_pallas.1} parent=5 // pred_check
      _
    $region30: #{conv2d_pallas.1} parent=5 // pred_check_branch
      %141 = sbr.rel (%p138) target = $region32
    $region31: #{conv2d_pallas.1} parent=5 // pred_region
      %s142 = ssub.s32 %s9, 1
      %p143 = scmp.lt.s32.totalorder %s14, 1
      %s144 = scalar_select %p143, %s14, 1
      %s145 = smul.addr %s144, 4
      %s146 = smul.addr %s145, 4
      %s147 = scalar_lea.vmem %s0, %s146
      %p148 = pneg %p35
      %p149 = pneg %p32
      %p150 = pneg %p56
      %p151 = pneg %p53
      %p152 = pneg %p77
      %p153 = pneg %p74
      %p154 = pneg %p103
      %p155 = pneg %p100
      %p156 = scmp.lt.s32.totalorder %s14, 1
      %s157 = scalar_select %p156, %s14, 1
      %s158 = smul.addr %s157, 8
      %s159 = scalar_lea.vmem %s3, %s158
      %p160 = scmp.lt.s32.totalorder %s14, 1
      %s161 = scalar_select %p160, %s14, 1
      %s162 = smul.addr %s161, 4
      %s163 = smul.addr %s162, 4
      %s164 = scalar_lea.vmem %s0, %s163
      %p165 = scmp.lt.s32.totalorder %s14, 1
      %s166 = scalar_select %p165, %s14, 1
      %s167 = smul.addr %s166, 8
      %s168 = scalar_lea.vmem %s3, %s167
      %v170 = vld [vmem:[%s164] sm:$0xf]
      %v171 = vld [vmem:[%s164 + $0x8] sm:$0xf]
      %v172 = vld [vmem:[%s164] sm:$0xff]
      %v173 = vld [vmem:[%s164 + $0x8] sm:$0xff]
      %v176 = vunpack.c.l.b16 %v170
      %v177 = vunpack.c.l.b16 %v171
      %v178 = vpack.c.b16 %v177, %v176
      %v182 = vunpack.c.l.b16 %v172
      %v183 = vunpack.c.h.b16 %v172
      %v184 = vunpack.c.l.b16 %v173
      %v185 = vunpack.c.h.b16 %v173
      %v186 = vpack.c.b16 %v184, %v182
      %v187 = vpack.c.b16 %v185, %v183
      %188 = vrot.lane.b32.xlu0 %v186, 127
      %v189 = vpop.permute.xlu0 %188
      %190 = vrot.lane.b32.xlu0 %v187, 127
      %v191 = vpop.permute.xlu0 %190
      %vm192 = vcmask 1039360
      %v193 = vsel %vm192, %v189, %v191
      %195 = vrot.lane.b32.xlu0 %v186, 119
      %v196 = vpop.permute.xlu0 %195
      %197 = vrot.lane.b32.xlu0 %v187, 119
      %v198 = vpop.permute.xlu0 %197
      %vm199 = vcmask 973824
      %v200 = vsel %vm199, %v196, %v198
      %202 = vrot.lane.b32.xlu0 %v186, 118
      %v203 = vpop.permute.xlu0 %202
      %204 = vrot.lane.b32.xlu0 %v187, 118
      %v205 = vpop.permute.xlu0 %204
      %vm206 = vcmask 965632
      %v207 = vsel %vm206, %v203, %v205
      %v209 = vld [vmem:[%s1] sm:$0xf]
      %v210 = vld [vmem:[%s2] sm:$0xff]
      %212 = vset.pattern.permute.xlu0 0
      %213 = vperm.xlu0 %212, %v210
      %v214 = vpop.permute.xlu0 %213
      %vm216 = vcmask 523264
      %v218 = vsel %vm216, %v209, 0
      %220 = vmatprep.subr.bf16.mxu0 0
      %221 = vmatpush1.bf16.msra.mxu0 %v178
      %222 = vmatprep.subr.bf16.mxu0 0
      %223 = vmatpush1.bf16.msra.mxu0 %v193
      %224 = vmatprep.subr.bf16.mxu0 0
      %225 = vmatpush1.bf16.msra.mxu0 %v200
      %226 = vmatprep.subr.bf16.mxu0 0
      %227 = vmatpush1.bf16.msra.mxu0 %v207
      %228 = vmatprep.subr.bf16.mxu0 0
      %229 = vmatpush1.bf16.msra.mxu0 0
      %230 = vmatprep.subr.bf16.mxu0 0
      %231 = vmatpush1.bf16.msra.mxu0 0
      %232 = vmatprep.subr.bf16.mxu0 0
      %233 = vmatpush1.bf16.msra.mxu0 0
      %234 = vmatprep.subr.bf16.mxu0 0
      %235 = vmatpush1.bf16.msra.mxu0 0
      %236 = vmatprep.subr.bf16.mxu0 0
      %237 = vmatpush1.bf16.msra.mxu0 0
      %238 = vmatprep.subr.bf16.mxu0 0
      %239 = vmatpush1.bf16.msra.mxu0 0
      %240 = vmatprep.subr.bf16.mxu0 0
      %241 = vmatpush1.bf16.msra.mxu0 0
      %242 = vmatprep.subr.bf16.mxu0 0
      %243 = vmatpush1.bf16.msra.mxu0 0
      %244 = vmatprep.subr.bf16.mxu0 0
      %245 = vmatpush1.bf16.msra.mxu0 0
      %246 = vmatprep.subr.bf16.mxu0 0
      %247 = vmatpush1.bf16.msra.mxu0 0
      %248 = vmatprep.subr.bf16.mxu0 0
      %249 = vmatpush1.bf16.msra.mxu0 0
      %250 = vmatprep.subr.bf16.mxu0 0
      %251 = vmatpush1.bf16.msra.mxu0 0
      %252 = vmatprep.mubr.bf16.mxu0 0
      %253 = vmatmul.mubr.bf16.gmra.mrb[0].mxu0 %v218
      %v254 = vpop.f32.mrb[0].mxu0
      %v255 = vadd.f32 %v214, %v254
      %v256 = vpop.f32.mrb[0].mxu0
      %v257 = vpop.f32.mrb[0].mxu0
      %v258 = vpop.f32.mrb[0].mxu0
      %259 = vdwg.mxu0
      %260 = vst [vmem:[%s168] sm:$0xff] %v255
      %p261 = scmp.lt.s32.totalorder %s14, 1
      %s262 = scalar_select %p261, %s14, 1
      %s263 = smul.addr %s262, 8
      %s264 = scalar_lea.vmem %s3, %s263
      // Predicated region
      $region33: #{conv2d_pallas.1} parent=31 // pred_check
        %p265 = pneg %p100
      $region34: #{conv2d_pallas.1} parent=31 // pred_check_branch
        %267 = sbr.rel (%p265) target = $region36
      $region35: #{conv2d_pallas.1} parent=31 // pred_region
        _
      $region36: #{conv2d_pallas.1} parent=31 // pred_fallthru
        _
    $region32: #{conv2d_pallas.1} parent=5 // pred_fallthru
      _
    %p268 = scmp.le.s32.totalorder 2, %s9
    // Predicated region
    $region37: #{conv2d_pallas.1} parent=5 // pred_check
      %p269 = pneg %p268
    $region38: #{conv2d_pallas.1} parent=5 // pred_check_branch
      %271 = sbr.rel (%p269) target = $region40
    $region39: #{conv2d_pallas.1} parent=5 // pred_region
      %s272 = ssub.s32 %s9, 2
      // Predicated region
      $region41: #{conv2d_pallas.1} parent=39 // pred_check
        %p273 = pneg %p106
      $region42: #{conv2d_pallas.1} parent=39 // pred_check_branch
        %275 = sbr.rel (%p273) target = $region44
      $region43: #{conv2d_pallas.1} parent=39 // pred_region
        %p276 = scmp.lt.s32.totalorder %s15, 1
        %s277 = scalar_select %p276, %s15, 1
        %s278 = smul.addr %s277, 8
        %s279 = scalar_lea.vmem %s3, %s278
      $region44: #{conv2d_pallas.1} parent=39 // pred_fallthru
        _
    $region40: #{conv2d_pallas.1} parent=5 // pred_fallthru
      _
  $region6: #{conv2d_pallas.1} parent=0 // loop_footer
    %s13 = sadd.s32 1, %s9
  $region7: #{conv2d_pallas.1} parent=0 // loop_footer_branch
    %8 = sbr.rel target = $region3
  $region8: #{conv2d_pallas.1} parent=0 // loop_exit
    _

</llo_original>
